<compile_context>
chip_gen: v6e
topology: v6e:2x2x1
jax: 0.10.0
libtpu: 0.0.40
codegen_flags: <defaults>
</compile_context>

<pallas_src>
import jax
import jax.numpy as jnp
from jax import lax
from jax.experimental import pallas as pl
from jax.experimental.pallas import tpu as pltpu


def _cdiv(a, b):
    return -(-a // b)


def _round_down_rows(v):
    if v >= 32:
        return (v // 32) * 32
    return max(8, (v // 8) * 8)


def _num_tensorcores():
    """Best-effort count of TensorCores one Pallas kernel can shard across."""
    try:
        info = pltpu.get_tpu_info()
        for name in ("num_cores", "core_count", "tensorcore_count",
                     "num_tensorcores", "cores_per_chip"):
            v = getattr(info, name, None)
            if isinstance(v, int) and v >= 1:
                return min(int(v), 2)
    except Exception:
        pass
    try:
        dev = jax.devices()[0]
        v = getattr(dev, "num_cores", None)
        if isinstance(v, int) and v >= 1:
            return min(int(v), 2)
        kind = str(getattr(dev, "device_kind", "")).lower()
        # v7x has 2 TCs per chip; v4 / v5p megacore also shard "parallel" axes.
        if ("v7" in kind) or ("tpu7" in kind) or ("v4" in kind) or ("v5p" in kind):
            return 2
    except Exception:
        pass
    return 1  # v5e / v6e (and safe default)


def _make_sums_kernel(tile_b, c, tiles_per_split, total_rows, need_mask,
                      mask_extra):
    """Per-tile reduction kernel (closes over static tiling params).

    Output accumulator block (8, C) f32 per split; row r holds the lane-wise
    partial sums of quantity r:
      0: sum(tp)        1: sum(tp * lp)   2: sum(fp * lp)
      3: sum(fn * lp)   4: sum(gt * lp)   5..7: zero padding
    The final cross-lane reduction is done once in the wrapper.
    """
    mask_fp, mask_fn, mask_gt = mask_extra

    def accumulate(out_ref, lp, tp, fp, fn, gt):
        # Sublane-only reductions -> (1, C) lane vectors (cheap, no cross-lane).
        s_tpm = jnp.sum(tp, axis=0, keepdims=True)
        s_tp = jnp.sum(tp * lp, axis=0, keepdims=True)
        s_fp = jnp.sum(fp * lp, axis=0, keepdims=True)
        s_fn = jnp.sum(fn * lp, axis=0, keepdims=True)
        s_gt = jnp.sum(gt * lp, axis=0, keepdims=True)
        row = lax.broadcasted_iota(jnp.int32, (8, c), 0)
        upd = jnp.where(row == 0, s_tpm,
              jnp.where(row == 1, s_tp,
              jnp.where(row == 2, s_fp,
              jnp.where(row == 3, s_fn,
              jnp.where(row == 4, s_gt, jnp.float32(0.0))))))
        out_ref[...] += upd

    def kernel(lp_ref, tp_ref, fp_ref, fn_ref, gt_ref, out_ref):
        split = pl.program_id(0)
        t = pl.program_id(1)

        # Zero the grid-resident per-split accumulator on the first step.
        @pl.when(t == 0)
        def _():
            out_ref[...] = jnp.zeros_like(out_ref)

        # Cast narrow dtypes (int8 masks, bf16 logprobs, ...) in-register.
        lp = lp_ref[...].astype(jnp.float32)
        tp = tp_ref[...].astype(jnp.float32)
        fp = fp_ref[...].astype(jnp.float32)
        fn = fn_ref[...].astype(jnp.float32)
        gt = gt_ref[...].astype(jnp.float32)

        if not need_mask:
            accumulate(out_ref, lp, tp, fp, fn, gt)
        else:
            # Unclamped logical tile index; edge tiles are the (single) partial
            # last tile and any clamped duplicate (whose rows are all >= B).
            tile_idx = split * tiles_per_split + t
            is_edge = (tile_idx + 1) * tile_b > total_rows

            @pl.when(jnp.logical_not(is_edge))
            def _():
                # Steady-state path: pure load-mul-add, no selects.
                accumulate(out_ref, lp, tp, fp, fn, gt)

            @pl.when(is_edge)
            def _():
                rows = tile_idx * tile_b + lax.broadcasted_iota(
                    jnp.int32, (tile_b, 1), 0)
                valid = rows < total_rows                 # (tile_b, 1)
                zero = jnp.float32(0.0)
                lp_m = jnp.where(valid, lp, zero)         # zeroes all lp-products
                tp_m = jnp.where(valid, tp, zero)         # needed for sum(tp)
                # Float-typed masks could hold NaN/Inf garbage in OOB rows
                # (0 * NaN = NaN), so mask those too; integer masks are safe.
                fp_m = jnp.where(valid, fp, zero) if mask_fp else fp
                fn_m = jnp.where(valid, fn, zero) if mask_fn else fn
                gt_m = jnp.where(valid, gt, zero) if mask_gt else gt
                accumulate(out_ref, lp_m, tp_m, fp_m, fn_m, gt_m)

    return kernel


def _masked_sums(logprobs, tp_masks, fp_masks, fn_masks, gt_masks,
                 max_tile_b=None, force_n_split=None):
    """Returns an (8,) f32 vector: the five global sums (rows 5..7 are zero)."""
    b, c = logprobs.shape
    inputs = (logprobs, tp_masks, fp_masks, fn_masks, gt_masks)
    bytes_per_row = sum(c * x.dtype.itemsize for x in inputs)
    # Double-buffered input tiles + conservative f32 in-register working set.
    step_row_bytes = 2 * bytes_per_row + 20 * c

    # ---- row-tile size ------------------------------------------------------
    budget = 12 * 1024 * 1024                      # input-tile budget per step
    cap = max(8, budget // step_row_bytes)
    cap = min(4096, _round_down_rows(cap))
    if max_tile_b is not None:
        cap = min(cap, max(8, _round_down_rows(max_tile_b)))

    tiny = (max_tile_b is None and force_n_split is None
            and b * bytes_per_row <= 2 * 1024 * 1024)
    if tiny:
        tile_b = b                                  # tiny problem: single tile
    elif b <= cap:
        tile_b = min(cap, max(32, ((b + 1) // 2 // 32) * 32))   # aim >= 2 tiles
    else:
        tile_b = cap
    tile_b = max(1, min(tile_b, b))

    total_tiles = _cdiv(b, tile_b)

    # ---- TensorCore split ---------------------------------------------------
    n_split = force_n_split if force_n_split is not None else _num_tensorcores()
    n_split = max(1, min(int(n_split), total_tiles))

    # If the tile count does not divide evenly, try to bump tile_b so it does
    # (exact split -> no duplicated clamped-tile DMA).
    if n_split > 1 and total_tiles % n_split != 0:
        target = (total_tiles // n_split) * n_split
        if target >= n_split:
            cand = ((_cdiv(b, target) + 31) // 32) * 32
            if cand <= cap and cand < b and _cdiv(b, cand) % n_split == 0:
                tile_b = cand
                total_tiles = _cdiv(b, cand)

    tiles_per_split = _cdiv(total_tiles, n_split)
    clamp_blocks = n_split * tiles_per_split > total_tiles
    need_mask = (n_split * tiles_per_split * tile_b) != b
    last_block = total_tiles - 1

    def row_map(split, t):
        idx = split * tiles_per_split + t
        if clamp_blocks:
            # Never start a DMA window past the end of the array; the in-kernel
            # edge path zeroes the duplicated tile's contribution.
            idx = jnp.minimum(idx, last_block)
        return (idx, 0)

    in_specs = [pl.BlockSpec((tile_b, c), row_map) for _ in inputs]
    out_specs = pl.BlockSpec((8, c), lambda split, t: (split, 0))

    mask_extra = tuple(jnp.issubdtype(x.dtype, jnp.inexact)
                       for x in (fp_masks, fn_masks, gt_masks))
    kernel = _make_sums_kernel(tile_b, c, tiles_per_split, b, need_mask,
                               mask_extra)

    # VMEM limit from the actual footprint (+40% headroom), capped for v7x.
    footprint = tile_b * step_row_bytes + 8 * c * 4 * 4
    vmem_limit = int(footprint * 1.4) + (2 << 20)
    vmem_limit = max(16 << 20, min(vmem_limit, 48 << 20))

    out = pl.pallas_call(
        kernel,
        out_shape=jax.ShapeDtypeStruct((n_split * 8, c), jnp.float32),
        grid_spec=pltpu.PrefetchScalarGridSpec(
            num_scalar_prefetch=0,
            grid=(n_split, tiles_per_split),        # reduction axis last
            in_specs=in_specs,
            out_specs=out_specs,
        ),
        compiler_params=pltpu.CompilerParams(
            dimension_semantics=("parallel", "arbitrary"),
            vmem_limit_bytes=vmem_limit,
        ),
    )(*inputs)

    # One final cross-lane / cross-split reduction in XLA (tiny).
    per_split = out.reshape(n_split, 8, c)
    return jnp.sum(per_split, axis=(0, 2))          # (8,)


def smooth_f1_criterion(logprobs, tp_masks, fp_masks, fn_masks, gt_masks,
                        max_tile_b=None, force_n_split=None):
    """JAX/Pallas equivalent of SmoothF1Criterion.forward.

    All inputs are (B, C); masks may be any dtype (cast in-kernel, matching the
    module's .float()).  Returns a float32 scalar: -f / B.
    """
    b = logprobs.shape[0]
    sums = _masked_sums(logprobs, tp_masks, fp_masks, fn_masks, gt_masks,
                        max_tile_b=max_tile_b, force_n_split=force_n_split)
    s_tpm = sums[0]   # sum(tp_masks)
    s_tp = sums[1]    # sum(tp_masks * logprobs)
    s_fp = sums[2]    # sum(fp_masks * logprobs)
    s_fn = sums[3]    # sum(fn_masks * logprobs)
    s_gt = sums[4]    # sum(gt_masks * logprobs)

    pr = s_tp / (s_tp + s_fp)
    re = s_tp / (s_tp + s_fn)
    f_harmonic = 2.0 * pr * re / (pr + re)

    # math.isclose(x, 0) with default tolerances (abs_tol=0) is exact x == 0.
    use_gt_inner = jnp.logical_or(pr == 0.0, re == 0.0)
    f_inner = jnp.where(use_gt_inner, s_gt, f_harmonic)

    f = jnp.where(s_tpm > 0.0, f_inner, s_gt)
    return -1.0 * f / jnp.float32(b)


def _reference(logprobs, tp_masks, fp_masks, fn_masks, gt_masks):
    """Pure-JAX re-implementation of the same math for correctness checks."""
    b = logprobs.shape[0]
    lp = logprobs.astype(jnp.float32).reshape(-1)
    tp = tp_masks.astype(jnp.float32).reshape(-1)
    fp = fp_masks.astype(jnp.float32).reshape(-1)
    fn = fn_masks.astype(jnp.float32).reshape(-1)
    gt = gt_masks.astype(jnp.float32).reshape(-1)
    s_tp = jnp.sum(tp * lp)
    pr = s_tp / (s_tp + jnp.sum(fp * lp))
    re = s_tp / (s_tp + jnp.sum(fn * lp))
    f = jnp.where(
        jnp.sum(tp) > 0,
        jnp.where((pr == 0) | (re == 0), jnp.sum(gt * lp),
                  2.0 * pr * re / (pr + re)),
        jnp.sum(gt * lp),
    )
    return -1.0 * f / b


if __name__ == "__main__":
    key = jax.random.PRNGKey(0)
    key_small, key_tiled, key_zero = jax.random.split(key, 3)

    def make_inputs(k, b, c):
        k_lp, k_tp, k_fp, k_fn = jax.random.split(k, 4)
        logits = jax.random.normal(k_lp, (b, c), dtype=jnp.float32)
        logprobs = jax.nn.log_softmax(logits, axis=-1)
        # Narrow int8 masks (the kernel casts in-register, like .float()).
        tp = (jax.random.uniform(k_tp, (b, c)) < 0.10).astype(jnp.int8)
        fp = (jax.random.uniform(k_fp, (b, c)) < 0.05).astype(jnp.int8)
        fn = (jax.random.uniform(k_fn, (b, c)) < 0.05).astype(jnp.int8)
        gt = jnp.clip(tp + fn, 0, 1).astype(jnp.int8)
        return logprobs, tp, fp, fn, gt

    def check(out, args, tag):
        jax.block_until_ready(out)
        ref = _reference(*args)
        assert jnp.allclose(out, ref, rtol=1e-4, atol=1e-6), (tag, out, ref)

    # Case 1: small B x C one-hot-style problem (tiny single-tile path).
    args_small = make_inputs(key_small, 4, 128)
    check(smooth_f1_criterion(*args_small), args_small, "small")

    # Case 2: tiled / pipelined path, auto split: 460 rows x 384 classes with a
    # forced 96-row tile -> 5 row-tiles, partial edge tile masked in-kernel.
    args_tiled = make_inputs(key_tiled, 460, 384)
    check(smooth_f1_criterion(*args_tiled, max_tile_b=96), args_tiled,
          "tiled-auto")

    # Case 3: forced 2-way split that divides evenly (exact split, edge tile
    # lands on split 1) -> exercises the multi-TC path without clamping.
    check(smooth_f1_criterion(*args_tiled, max_tile_b=128, force_n_split=2),
          args_tiled, "tiled-split-exact")

    # Case 4: forced 2-way split with an odd tile count that cannot be bumped
    # under the tile cap -> exercises the clamped duplicate tile (masked to
    # contribute zero) plus the partial edge tile.
    check(smooth_f1_criterion(*args_tiled, max_tile_b=96, force_n_split=2),
          args_tiled, "tiled-split-clamp")

    # Case 5: sum(tp_masks) == 0 -> the "else" branch (f = sum(gt * logprobs)).
    lp5, _, fp5, fn5, _ = make_inputs(key_zero, 4, 128)
    tp5 = jnp.zeros((4, 128), jnp.int8)
    gt5 = (jax.random.uniform(key_zero, (4, 128)) < 0.2).astype(jnp.int8)
    args_zero = (lp5, tp5, fp5, fn5, gt5)
    check(smooth_f1_criterion(*args_zero), args_zero, "zero-tp-branch")

    print("KERNEL_OK")
</pallas_src>

<mosaic_0001>
module attributes {stable_mosaic.version = 11 : i64} {
  func.func @kernel(%arg0: i32, %arg1: i32, %arg2: memref<4x128xf32, #tpu.memory_space<vmem>>, %arg3: memref<4x128xi8, #tpu.memory_space<vmem>>, %arg4: memref<4x128xi8, #tpu.memory_space<vmem>>, %arg5: memref<4x128xi8, #tpu.memory_space<vmem>>, %arg6: memref<4x128xi8, #tpu.memory_space<vmem>>, %arg7: memref<8x128xf32, #tpu.memory_space<vmem>>) attributes {dimension_semantics = [#tpu.dimension_semantics<parallel>, #tpu.dimension_semantics<arbitrary>], iteration_bounds = array<i64: 1, 1>, scalar_prefetch = 0 : i64, scratch_operands = 0 : i64, tpu.core_type = #tpu.core_type<tc>, window_params = [{transform_indices = @transform_0, window_bounds = array<i64: 4, 128>}, {transform_indices = @transform_1, window_bounds = array<i64: 4, 128>}, {transform_indices = @transform_2, window_bounds = array<i64: 4, 128>}, {transform_indices = @transform_3, window_bounds = array<i64: 4, 128>}, {transform_indices = @transform_4, window_bounds = array<i64: 4, 128>}, {transform_indices = @transform_5, window_bounds = array<i64: 8, 128>}]} {
    %c0_i32 = arith.constant 0 : i32
    %0 = arith.cmpi eq, %arg1, %c0_i32 : i32
    %1 = arith.extui %0 : i1 to i32
    %c0_i32_0 = arith.constant 0 : i32
    %2 = arith.cmpi ne, %1, %c0_i32_0 : i32
    scf.if %2 {
      %cst_20 = arith.constant 0.000000e+00 : f32
      %56 = vector.broadcast %cst_20 : f32 to vector<8x128xf32>
      %c0_21 = arith.constant 0 : index
      %c0_22 = arith.constant 0 : index
      %57 = vector.load %arg7[%c0_21, %c0_22] : memref<8x128xf32, #tpu.memory_space<vmem>>, vector<8x128xf32>
      tpu.vector_store %arg7[%c0_21, %c0_22], %56 {strides = array<i32>} : memref<8x128xf32, #tpu.memory_space<vmem>>, vector<8x128xf32>,
    } else {
    }
    %c0 = arith.constant 0 : index
    %c0_1 = arith.constant 0 : index
    %3 = vector.load %arg2[%c0, %c0_1] : memref<4x128xf32, #tpu.memory_space<vmem>>, vector<4x128xf32>
    %c0_2 = arith.constant 0 : index
    %c0_3 = arith.constant 0 : index
    %4 = vector.load %arg3[%c0_2, %c0_3] : memref<4x128xi8, #tpu.memory_space<vmem>>, vector<4x128xi8>
    %5 = arith.sitofp %4 : vector<4x128xi8> to vector<4x128xf32>
    %c0_4 = arith.constant 0 : index
    %c0_5 = arith.constant 0 : index
    %6 = vector.load %arg4[%c0_4, %c0_5] : memref<4x128xi8, #tpu.memory_space<vmem>>, vector<4x128xi8>
    %7 = arith.sitofp %6 : vector<4x128xi8> to vector<4x128xf32>
    %c0_6 = arith.constant 0 : index
    %c0_7 = arith.constant 0 : index
    %8 = vector.load %arg5[%c0_6, %c0_7] : memref<4x128xi8, #tpu.memory_space<vmem>>, vector<4x128xi8>
    %9 = arith.sitofp %8 : vector<4x128xi8> to vector<4x128xf32>
    %c0_8 = arith.constant 0 : index
    %c0_9 = arith.constant 0 : index
    %10 = vector.load %arg6[%c0_8, %c0_9] : memref<4x128xi8, #tpu.memory_space<vmem>>, vector<4x128xi8>
    %11 = arith.sitofp %10 : vector<4x128xi8> to vector<4x128xf32>
    %cst = arith.constant dense<0.000000e+00> : vector<128xf32>
    %12 = vector.multi_reduction <add>, %5, %cst [0] : vector<4x128xf32> to vector<128xf32>
    %13 = vector.shape_cast %12 : vector<128xf32> to vector<1x128xf32>
    %14 = arith.mulf %5, %3 : vector<4x128xf32>
    %cst_10 = arith.constant dense<0.000000e+00> : vector<128xf32>
    %15 = vector.multi_reduction <add>, %14, %cst_10 [0] : vector<4x128xf32> to vector<128xf32>
    %16 = vector.shape_cast %15 : vector<128xf32> to vector<1x128xf32>
    %17 = arith.mulf %7, %3 : vector<4x128xf32>
    %cst_11 = arith.constant dense<0.000000e+00> : vector<128xf32>
    %18 = vector.multi_reduction <add>, %17, %cst_11 [0] : vector<4x128xf32> to vector<128xf32>
    %19 = vector.shape_cast %18 : vector<128xf32> to vector<1x128xf32>
    %20 = arith.mulf %9, %3 : vector<4x128xf32>
    %cst_12 = arith.constant dense<0.000000e+00> : vector<128xf32>
    %21 = vector.multi_reduction <add>, %20, %cst_12 [0] : vector<4x128xf32> to vector<128xf32>
    %22 = vector.shape_cast %21 : vector<128xf32> to vector<1x128xf32>
    %23 = arith.mulf %11, %3 : vector<4x128xf32>
    %cst_13 = arith.constant dense<0.000000e+00> : vector<128xf32>
    %24 = vector.multi_reduction <add>, %23, %cst_13 [0] : vector<4x128xf32> to vector<128xf32>
    %25 = vector.shape_cast %24 : vector<128xf32> to vector<1x128xf32>
    %26 = tpu.iota {dimensions = array<i32: 0>} : vector<8x128xi32>
    %c0_i32_14 = arith.constant 0 : i32
    %27 = vector.broadcast %c0_i32_14 : i32 to vector<8x128xi32>
    %28 = arith.cmpi eq, %26, %27 : vector<8x128xi32>
    %c1_i32 = arith.constant 1 : i32
    %29 = vector.broadcast %c1_i32 : i32 to vector<8x128xi32>
    %30 = arith.cmpi eq, %26, %29 : vector<8x128xi32>
    %c2_i32 = arith.constant 2 : i32
    %31 = vector.broadcast %c2_i32 : i32 to vector<8x128xi32>
    %32 = arith.cmpi eq, %26, %31 : vector<8x128xi32>
    %c3_i32 = arith.constant 3 : i32
    %33 = vector.broadcast %c3_i32 : i32 to vector<8x128xi32>
    %34 = arith.cmpi eq, %26, %33 : vector<8x128xi32>
    %c4_i32 = arith.constant 4 : i32
    %35 = vector.broadcast %c4_i32 : i32 to vector<8x128xi32>
    %36 = arith.cmpi eq, %26, %35 : vector<8x128xi32>
    %cst_15 = arith.constant 0.000000e+00 : f32
    %37 = vector.shape_cast %25 : vector<1x128xf32> to vector<1x128xf32>
    %38 = vector.broadcast %37 : vector<1x128xf32> to vector<8x128xf32>
    %39 = vector.broadcast %cst_15 : f32 to vector<8x128xf32>
    %40 = arith.select %36, %38, %39 : vector<8x128xi1>, vector<8x128xf32>
    %41 = vector.shape_cast %22 : vector<1x128xf32> to vector<1x128xf32>
    %42 = vector.broadcast %41 : vector<1x128xf32> to vector<8x128xf32>
    %43 = arith.select %34, %42, %40 : vector<8x128xi1>, vector<8x128xf32>
    %44 = vector.shape_cast %19 : vector<1x128xf32> to vector<1x128xf32>
    %45 = vector.broadcast %44 : vector<1x128xf32> to vector<8x128xf32>
    %46 = arith.select %32, %45, %43 : vector<8x128xi1>, vector<8x128xf32>
    %47 = vector.shape_cast %16 : vector<1x128xf32> to vector<1x128xf32>
    %48 = vector.broadcast %47 : vector<1x128xf32> to vector<8x128xf32>
    %49 = arith.select %30, %48, %46 : vector<8x128xi1>, vector<8x128xf32>
    %50 = vector.shape_cast %13 : vector<1x128xf32> to vector<1x128xf32>
    %51 = vector.broadcast %50 : vector<1x128xf32> to vector<8x128xf32>
    %52 = arith.select %28, %51, %49 : vector<8x128xi1>, vector<8x128xf32>
    %c0_16 = arith.constant 0 : index
    %c0_17 = arith.constant 0 : index
    %53 = vector.load %arg7[%c0_16, %c0_17] : memref<8x128xf32, #tpu.memory_space<vmem>>, vector<8x128xf32>
    %54 = arith.addf %53, %52 : vector<8x128xf32>
    %c0_18 = arith.constant 0 : index
    %c0_19 = arith.constant 0 : index
    %55 = vector.load %arg7[%c0_18, %c0_19] : memref<8x128xf32, #tpu.memory_space<vmem>>, vector<8x128xf32>
    tpu.vector_store %arg7[%c0_18, %c0_19], %54 {strides = array<i32>} : memref<8x128xf32, #tpu.memory_space<vmem>>, vector<8x128xf32>,
    return
  }
  func.func @transform_0(%arg0: i32, %arg1: i32) -> (i32, i32) {
    %c1_i32 = arith.constant 1 : i32
    %0 = arith.muli %arg0, %c1_i32 : i32
    %1 = arith.addi %0, %arg1 : i32
    %c0_i32 = arith.constant 0 : i32
    %c0_i32_0 = arith.constant 0 : i32
    return %1, %c0_i32 : i32, i32
  }
  func.func @transform_1(%arg0: i32, %arg1: i32) -> (i32, i32) {
    %c1_i32 = arith.constant 1 : i32
    %0 = arith.muli %arg0, %c1_i32 : i32
    %1 = arith.addi %0, %arg1 : i32
    %c0_i32 = arith.constant 0 : i32
    %c0_i32_0 = arith.constant 0 : i32
    return %1, %c0_i32 : i32, i32
  }
  func.func @transform_2(%arg0: i32, %arg1: i32) -> (i32, i32) {
    %c1_i32 = arith.constant 1 : i32
    %0 = arith.muli %arg0, %c1_i32 : i32
    %1 = arith.addi %0, %arg1 : i32
    %c0_i32 = arith.constant 0 : i32
    %c0_i32_0 = arith.constant 0 : i32
    return %1, %c0_i32 : i32, i32
  }
  func.func @transform_3(%arg0: i32, %arg1: i32) -> (i32, i32) {
    %c1_i32 = arith.constant 1 : i32
    %0 = arith.muli %arg0, %c1_i32 : i32
    %1 = arith.addi %0, %arg1 : i32
    %c0_i32 = arith.constant 0 : i32
    %c0_i32_0 = arith.constant 0 : i32
    return %1, %c0_i32 : i32, i32
  }
  func.func @transform_4(%arg0: i32, %arg1: i32) -> (i32, i32) {
    %c1_i32 = arith.constant 1 : i32
    %0 = arith.muli %arg0, %c1_i32 : i32
    %1 = arith.addi %0, %arg1 : i32
    %c0_i32 = arith.constant 0 : i32
    %c0_i32_0 = arith.constant 0 : i32
    return %1, %c0_i32 : i32, i32
  }
  func.func @transform_5(%arg0: i32, %arg1: i32) -> (i32, i32) {
    %c0_i32 = arith.constant 0 : i32
    %c0_i32_0 = arith.constant 0 : i32
    return %arg0, %c0_i32 : i32, i32
  }
}

</mosaic_0001>

<llo_original>
// kernel: tpu_custom_call.1
$region0: #{tpu_custom_call.1}
  #allocation0 [shape = 'u32[]', space=smem, size = 0x4, offset = 0x4, fixed_abs, tag = 'smem constant byte address 0x4 - core index']
  #allocation1 [shape = 'u32[144,128]{1,0:T(1,128)}', space=vmem, size = 0x12000, scoped, tag = 'internal scratch']
  %s0 = inlined_call_operand.hbm [shape: f32[4,128], index: 0, kind: input, shape index: {}]
  %s1 = inlined_call_operand.vmem [shape: s8[4,128], index: 1, kind: input, shape index: {}]
  %s2 = inlined_call_operand.vmem [shape: s8[4,128], index: 2, kind: input, shape index: {}]
  %s3 = inlined_call_operand.vmem [shape: s8[4,128], index: 3, kind: input, shape index: {}]
  %s4 = inlined_call_operand.vmem [shape: s8[4,128], index: 4, kind: input, shape index: {}]
  %s5 = inlined_call_operand.hbm [shape: f32[8,128], index: 5, kind: output, shape index: {}]
  %s6 = sld [smem:[#allocation0]]
  $region38: #{tpu_custom_call.1} parent=0
    _
  %s8 = ssub.s32 1, %s6
  %s9 = scalar_select 0, %s8, %s6
  $region1: #{tpu_custom_call.1} parent=0
    #allocation2 [shape = 'u8[2048]{0}', space=vmem, size = 0x800, scoped, tag = 'input window, operand 0, single buffered']
    #allocation3 [shape = 's32[1]{0}', space=sflag, size = 0x4, scoped, tag = 'scoped memory for tpu_custom_call.1']
    #allocation4 [shape = 's32[1]{0}', space=sflag, size = 0x4, scoped, tag = 'scoped memory for tpu_custom_call.1']
    #allocation5 [shape = 'u8[4096]{0}', space=vmem, size = 0x1000, scoped, tag = 'output window, operand 0, single buffered']
    %10 = vsyncpa [#allocation3], 0
    %11 = vsyncpa [#allocation4], 0
    // Predicated region
    $region2: #{tpu_custom_call.1} parent=1 // pred_check
      _
    $region3: #{tpu_custom_call.1} parent=1 // pred_check_branch
      %13 = sbr.rel (0) target = $region5
    $region4: #{tpu_custom_call.1} parent=1 // pred_region
      %s14 = sadd.s32 0, 0
      %s16 = ssub.s32 64, 64
      %17 = vsyncadd [#allocation3], %s16
      %s18 = smul.addr %s14, 64
      %s19 = scalar_lea.hbm %s0, %s18
      %s21 = sshll.u32 [#allocation2], 4
      %s22 = int_to_ptr.vmem [resolvable:$true] %s21
      %24 = dma.hbm_to_vmem [thread:$0]  %s19, 64, %s22, [#allocation3]
    $region5: #{tpu_custom_call.1} parent=1 // pred_fallthru
      _
    // Predicated region
    $region6: #{tpu_custom_call.1} parent=1 // pred_check
      _
    $region7: #{tpu_custom_call.1} parent=1 // pred_check_branch
      %26 = sbr.rel (0) target = $region9
    $region8: #{tpu_custom_call.1} parent=1 // pred_region
      %s27 = sadd.s32 0, 0
      %p28 = scmp.lt.s32.totalorder %s27, 0
      %s29 = scalar_select %p28, %s27, 0
      %s30 = scalar_lea.vmem %s1, %s29
      %s31 = sadd.s32 0, 0
    $region9: #{tpu_custom_call.1} parent=1 // pred_fallthru
      _
    // Predicated region
    $region10: #{tpu_custom_call.1} parent=1 // pred_check
      _
    $region11: #{tpu_custom_call.1} parent=1 // pred_check_branch
      %33 = sbr.rel (0) target = $region13
    $region12: #{tpu_custom_call.1} parent=1 // pred_region
      %s34 = sadd.s32 0, 0
      %p35 = scmp.lt.s32.totalorder %s34, 0
      %s36 = scalar_select %p35, %s34, 0
      %s37 = scalar_lea.vmem %s2, %s36
      %s38 = sadd.s32 0, 0
    $region13: #{tpu_custom_call.1} parent=1 // pred_fallthru
      _
    // Predicated region
    $region14: #{tpu_custom_call.1} parent=1 // pred_check
      _
    $region15: #{tpu_custom_call.1} parent=1 // pred_check_branch
      %40 = sbr.rel (0) target = $region17
    $region16: #{tpu_custom_call.1} parent=1 // pred_region
      %s41 = sadd.s32 0, 0
      %p42 = scmp.lt.s32.totalorder %s41, 0
      %s43 = scalar_select %p42, %s41, 0
      %s44 = scalar_lea.vmem %s3, %s43
      %s45 = sadd.s32 0, 0
    $region17: #{tpu_custom_call.1} parent=1 // pred_fallthru
      _
    // Predicated region
    $region18: #{tpu_custom_call.1} parent=1 // pred_check
      _
    $region19: #{tpu_custom_call.1} parent=1 // pred_check_branch
      %47 = sbr.rel (0) target = $region21
    $region20: #{tpu_custom_call.1} parent=1 // pred_region
      %s48 = sadd.s32 0, 0
      %p49 = scmp.lt.s32.totalorder %s48, 0
      %s50 = scalar_select %p49, %s48, 0
      %s51 = scalar_lea.vmem %s4, %s50
      %s52 = sadd.s32 0, 0
    $region21: #{tpu_custom_call.1} parent=1 // pred_fallthru
      _
    // Predicated region
    $region22: #{tpu_custom_call.1} parent=1 // pred_check
      _
    $region23: #{tpu_custom_call.1} parent=1 // pred_check_branch
      %54 = sbr.rel (0) target = $region25
    $region24: #{tpu_custom_call.1} parent=1 // pred_region
      %55 = dma.done [#allocation3], 64
    $region25: #{tpu_custom_call.1} parent=1 // pred_fallthru
      _
    %s56 = sadd.s32 0, 0
    %p57 = scmp.lt.s32.totalorder %s56, 0
    %s58 = scalar_select %p57, %s56, 0
    %s59 = scalar_lea.vmem %s1, %s58
    %s60 = sadd.s32 0, 0
    %p61 = scmp.lt.s32.totalorder %s60, 0
    %s62 = scalar_select %p61, %s60, 0
    %s63 = scalar_lea.vmem %s2, %s62
    %s64 = sadd.s32 0, 0
    %p65 = scmp.lt.s32.totalorder %s64, 0
    %s66 = scalar_select %p65, %s64, 0
    %s67 = scalar_lea.vmem %s3, %s66
    %s68 = sadd.s32 0, 0
    %p69 = scmp.lt.s32.totalorder %s68, 0
    %s70 = scalar_select %p69, %s68, 0
    %s71 = scalar_lea.vmem %s4, %s70
    %s72 = sadd.s32 0, 0
    %s73 = sadd.s32 0, 0
    %p74 = scmp.lt.s32.totalorder %s73, 0
    %s75 = scalar_select %p74, %s73, 0
    %s76 = scalar_lea.vmem %s1, %s75
    %s77 = sadd.s32 0, 0
    %s78 = sadd.s32 0, 0
    %p79 = scmp.lt.s32.totalorder %s78, 0
    %s80 = scalar_select %p79, %s78, 0
    %s81 = scalar_lea.vmem %s2, %s80
    %s82 = sadd.s32 0, 0
    %s83 = sadd.s32 0, 0
    %p84 = scmp.lt.s32.totalorder %s83, 0
    %s85 = scalar_select %p84, %s83, 0
    %s86 = scalar_lea.vmem %s3, %s85
    %s87 = sadd.s32 0, 0
    %s88 = sadd.s32 0, 0
    %p89 = scmp.lt.s32.totalorder %s88, 0
    %s90 = scalar_select %p89, %s88, 0
    %s91 = scalar_lea.vmem %s4, %s90
    %s92 = sadd.s32 0, 0
    %p93 = scmp.eq.s32.totalorder 0, 0
    // Predicated region
    $region26: #{tpu_custom_call.1} parent=1 // pred_check
      %p94 = pneg %p93
    $region27: #{tpu_custom_call.1} parent=1 // pred_check_branch
      %96 = sbr.rel (%p94) target = $region29
    $region28: #{tpu_custom_call.1} parent=1 // pred_region
      %97 = vst [vmem:[#allocation5] sm:$0xff] 0.0
    $region29: #{tpu_custom_call.1} parent=1 // pred_fallthru
      _
    %v98 = vld [vmem:[#allocation2] sm:$0xf]
    %v99 = vld [vmem:[%s76] sm:$0x1]
    %v100 = vunpack.c.0.s8 %v99
    %v101 = vcvt.s32.f32 %v100
    %v102 = vld [vmem:[%s81] sm:$0x1]
    %v103 = vunpack.c.0.s8 %v102
    %v104 = vcvt.s32.f32 %v103
    %v105 = vld [vmem:[%s86] sm:$0x1]
    %v106 = vunpack.c.0.s8 %v105
    %v107 = vcvt.s32.f32 %v106
    %v108 = vld [vmem:[%s91] sm:$0x1]
    %v109 = vunpack.c.0.s8 %v108
    %v110 = vcvt.s32.f32 %v109
    %vm111 = vcmask 1043456
    %v112 = vsel %vm111, %v101, 0.0
    %v113 = vrot.slane %v112, 4
    %v114 = vadd.f32 %v112, %v113
    %v115 = vrot.slane %v114, 2
    %v116 = vadd.f32 %v114, %v115
    %v117 = vrot.slane %v116, 1
    %v118 = vadd.f32 %v116, %v117
    %v119 = vmul.f32 %v101, %v98
    %v120 = vsel %vm111, %v119, 0.0
    %v121 = vrot.slane %v120, 4
    %v122 = vadd.f32 %v120, %v121
    %v123 = vrot.slane %v122, 2
    %v124 = vadd.f32 %v122, %v123
    %v125 = vrot.slane %v124, 1
    %v126 = vadd.f32 %v124, %v125
    %v127 = vmul.f32 %v104, %v98
    %v128 = vsel %vm111, %v127, 0.0
    %v129 = vrot.slane %v128, 4
    %v130 = vadd.f32 %v128, %v129
    %v131 = vrot.slane %v130, 2
    %v132 = vadd.f32 %v130, %v131
    %v133 = vrot.slane %v132, 1
    %v134 = vadd.f32 %v132, %v133
    %v135 = vmul.f32 %v107, %v98
    %v136 = vsel %vm111, %v135, 0.0
    %v137 = vrot.slane %v136, 4
    %v138 = vadd.f32 %v136, %v137
    %v139 = vrot.slane %v138, 2
    %v140 = vadd.f32 %v138, %v139
    %v141 = vrot.slane %v140, 1
    %v142 = vadd.f32 %v140, %v141
    %v143 = vmul.f32 %v110, %v98
    %v144 = vsel %vm111, %v143, 0.0
    %v145 = vrot.slane %v144, 4
    %v146 = vadd.f32 %v144, %v145
    %v147 = vrot.slane %v146, 2
    %v148 = vadd.f32 %v146, %v147
    %v149 = vrot.slane %v148, 1
    %v150 = vadd.f32 %v148, %v149
    %v151 = vlaneseq
    %v152 = vshrl.u32 %v151, 7
    %vm153 = vcmp.eq.s32.totalorder %v152, 0
    %vm154 = vcmp.eq.s32.totalorder %v152, 1
    %vm155 = vcmp.eq.s32.totalorder %v152, 2
    %vm156 = vcmp.eq.s32.totalorder %v152, 3
    %vm157 = vcmp.eq.s32.totalorder %v152, 4
    %v158 = vsel %vm157, %v150, 0.0
    %v159 = vsel %vm156, %v142, %v158
    %v160 = vsel %vm155, %v134, %v159
    %v161 = vsel %vm154, %v126, %v160
    %v162 = vsel %vm153, %v118, %v161
    %v163 = vld [vmem:[#allocation5] sm:$0xff]
    %v164 = vadd.f32 %v163, %v162
    %165 = vst [vmem:[#allocation5] sm:$0xff] %v164
    // Predicated region
    $region30: #{tpu_custom_call.1} parent=1 // pred_check
      _
    $region31: #{tpu_custom_call.1} parent=1 // pred_check_branch
      %167 = sbr.rel (0) target = $region33
    $region32: #{tpu_custom_call.1} parent=1 // pred_region
      %s169 = ssub.s32 128, 128
      %170 = vsyncadd [#allocation4], %s169
      %s172 = sshll.u32 [#allocation5], 4
      %s173 = int_to_ptr.vmem [resolvable:$true] %s172
      %175 = dma.vmem_to_hbm [thread:$0]  %s173, 128, %s5, [#allocation4]
    $region33: #{tpu_custom_call.1} parent=1 // pred_fallthru
      _
    // Predicated region
    $region34: #{tpu_custom_call.1} parent=1 // pred_check
      _
    $region35: #{tpu_custom_call.1} parent=1 // pred_check_branch
      %177 = sbr.rel (0) target = $region37
    $region36: #{tpu_custom_call.1} parent=1 // pred_region
      %178 = dma.done [#allocation4], 128
    $region37: #{tpu_custom_call.1} parent=1 // pred_fallthru
      _
    %179 = vsyncpa [#allocation3], 1
    %180 = vsyncpa [#allocation4], 1

</llo_original>
